<compile_context>
chip_gen: v7x
topology: tpu7x:2x2x1
jax: 0.10.0
libtpu: 0.0.40
codegen_flags: <defaults>
</compile_context>

<pallas_src>
import jax
import jax.numpy as jnp
from jax.experimental import pallas as pl
from jax.experimental.pallas import tpu as pltpu

_INV_SQRT2 = 0.7071067811865476


def mlp_kernel(x_ref, w1_ref, b1_ref, w2_ref, b2_ref, o_ref):
    # x_ref:  (Nb, C_in, tl)   o_ref:  (Nb, C_out, tl)
    # w1_ref: (mid, C_in)      b1_ref: (mid, 1)
    # w2_ref: (C_out, mid)     b2_ref: (C_out, 1)
    nb = x_ref.shape[0]

    # Hoist the (tiny) weight/bias loads out of the batch loop.
    w1 = w1_ref[...]
    b1 = b1_ref[...]
    w2 = w2_ref[...]
    b2 = b2_ref[...]

    def body(b, carry):
        x = x_ref[b]                                             # (C_in, tl)
        h = jnp.dot(w1, x, preferred_element_type=jnp.float32) + b1
        # Exact GELU (erf-based), matching torch.nn.functional.gelu default.
        g = 0.5 * h * (1.0 + jax.lax.erf(h * jnp.float32(_INV_SQRT2)))
        y = jnp.dot(w2, g.astype(w2.dtype),
                    preferred_element_type=jnp.float32) + b2
        o_ref[b] = y.astype(o_ref.dtype)
        return carry

    # fori_loop (not a Python for) bounds the live range of h/g to one batch
    # row -> at most ~(mid, tl) f32 live -> no vreg spills even at tl=1024.
    jax.lax.fori_loop(0, nb, body, 0)


def _choose_lane_tile(L, tl_target):
    """Full-extent block if L is small; otherwise a 128-multiple lane tile.

    The last L block may be ragged (Pallas masks the edge DMA), so no exact
    divisor / padding logic is needed.
    """
    tl_target = max(int(tl_target), 128)       # guard tl_target < 128
    if L <= tl_target:
        return L                               # full extent (always legal)
    return (tl_target // 128) * 128            # lane-aligned tile


def _choose_batch_tile(N, nb_target):
    """Largest divisor of N that is <= nb_target (keeps the grid exact)."""
    nb = max(1, min(int(nb_target), N))
    while N % nb != 0:
        nb -= 1
    return nb


def mlp_pallas(x_ncl, w1, b1, w2, b2, *, tl_target=1024, nb_target=16):
    """x_ncl: (N, C_in, L); w1: (mid, C_in); b1: (mid,); w2: (C_out, mid); b2: (C_out,)."""
    N, C_in, L = x_ncl.shape
    mid = w1.shape[0]
    C_out = w2.shape[0]

    tl = _choose_lane_tile(L, tl_target)
    nb = _choose_batch_tile(N, nb_target)

    b1_c = b1.reshape(mid, 1)
    b2_c = b2.reshape(C_out, 1)

    grid = (N // nb, pl.cdiv(L, tl))

    return pl.pallas_call(
        mlp_kernel,
        out_shape=jax.ShapeDtypeStruct((N, C_out, L), x_ncl.dtype),
        grid_spec=pltpu.PrefetchScalarGridSpec(
            num_scalar_prefetch=0,
            grid=grid,
            in_specs=[
                # Activations: Nb batch rows folded per step, L tiled on lanes.
                pl.BlockSpec((nb, C_in, tl), lambda n, j: (n, 0, j)),
                # Weights/biases: block-invariant (constant index_map).
                pl.BlockSpec((mid, C_in), lambda n, j: (0, 0)),
                pl.BlockSpec((mid, 1), lambda n, j: (0, 0)),
                pl.BlockSpec((C_out, mid), lambda n, j: (0, 0)),
                pl.BlockSpec((C_out, 1), lambda n, j: (0, 0)),
            ],
            out_specs=pl.BlockSpec((nb, C_out, tl), lambda n, j: (n, 0, j)),
        ),
        compiler_params=pltpu.CompilerParams(
            # Independent grid axes -> megacore sharding on v7x; no-op elsewhere.
            dimension_semantics=("parallel", "parallel"),
            # ~1 MiB double-buffered blocks; 32 MiB is safe on v5e/v6e/v7x.
            vmem_limit_bytes=32 * 1024 * 1024,
        ),
    )(x_ncl, w1, b1_c, w2, b2_c)


def init_params(key, in_channels, out_channels, mid_channels, dtype=jnp.float32):
    # Conv1d k=1 weight shapes: (out, in, 1) -> stored as (out, in).
    k1, k2, k3, k4 = jax.random.split(key, 4)
    bound1 = 1.0 / (in_channels ** 0.5)
    bound2 = 1.0 / (mid_channels ** 0.5)
    w1 = jax.random.uniform(k1, (mid_channels, in_channels), dtype, -bound1, bound1)
    b1 = jax.random.uniform(k2, (mid_channels,), dtype, -bound1, bound1)
    w2 = jax.random.uniform(k3, (out_channels, mid_channels), dtype, -bound2, bound2)
    b2 = jax.random.uniform(k4, (out_channels,), dtype, -bound2, bound2)
    return w1, b1, w2, b2


def mlp_reference(x_ncl, w1, b1, w2, b2):
    # Pure-JAX reference of the PyTorch forward (1x1 Conv1d == per-position linear).
    h = jnp.einsum('ncl,mc->nml', x_ncl, w1) + b1[None, :, None]
    g = 0.5 * h * (1.0 + jax.lax.erf(h * _INV_SQRT2))
    return jnp.einsum('nml,om->nol', g, w2) + b2[None, :, None]


if __name__ == "__main__":
    key = jax.random.PRNGKey(0)
    kx, kp = jax.random.split(key)

    C_in, mid, C_out = 4, 32, 4
    w1, b1, w2, b2 = init_params(kp, C_in, C_out, mid)

    # Small case (single full-extent block, whole batch folded into one step).
    N, L = 2, 16
    x = jax.random.normal(kx, (N, C_in, L), jnp.float32)
    out = jax.block_until_ready(mlp_pallas(x, w1, b1, w2, b2))
    ref = mlp_reference(x, w1, b1, w2, b2)
    assert out.shape == (N, C_out, L)
    assert jnp.allclose(out, ref, atol=1e-5, rtol=1e-5)

    # Tiled case (L divisible by the lane tile; multiple L blocks).
    x_big = jax.random.normal(kx, (N, C_in, 640), jnp.float32)
    out_big = jax.block_until_ready(
        mlp_pallas(x_big, w1, b1, w2, b2, tl_target=256))
    ref_big = mlp_reference(x_big, w1, b1, w2, b2)
    assert out_big.shape == (N, C_out, 640)
    assert jnp.allclose(out_big, ref_big, atol=1e-5, rtol=1e-5)

    # Ragged case (L not divisible by the tile; no wrapper pad/slice copies)
    # + batch folding across multiple grid steps.
    x_odd = jax.random.normal(kx, (8, C_in, 200), jnp.float32)
    out_odd = jax.block_until_ready(
        mlp_pallas(x_odd, w1, b1, w2, b2, tl_target=128, nb_target=4))
    ref_odd = mlp_reference(x_odd, w1, b1, w2, b2)
    assert out_odd.shape == (8, C_out, 200)
    assert jnp.allclose(out_odd, ref_odd, atol=1e-5, rtol=1e-5)

    print("KERNEL_OK")
</pallas_src>

<mosaic_0001>
module attributes {stable_mosaic.version = 11 : i64} {
  func.func @mlp_kernel(%arg0: i32, %arg1: i32, %arg2: memref<2x4x16xf32, #tpu.memory_space<vmem>>, %arg3: memref<32x4xf32, #tpu.memory_space<vmem>>, %arg4: memref<32x1xf32, #tpu.memory_space<vmem>>, %arg5: memref<4x32xf32, #tpu.memory_space<vmem>>, %arg6: memref<4x1xf32, #tpu.memory_space<vmem>>, %arg7: memref<2x4x16xf32, #tpu.memory_space<vmem>>) attributes {dimension_semantics = [#tpu.dimension_semantics<parallel>, #tpu.dimension_semantics<parallel>], iteration_bounds = array<i64: 1, 1>, scalar_prefetch = 0 : i64, scratch_operands = 0 : i64, tpu.core_type = #tpu.core_type<tc>, window_params = [{transform_indices = @transform_0, window_bounds = array<i64: 2, 4, 16>}, {pipeline_mode = #tpu.pipeline_mode<synchronous>, transform_indices = @transform_1, window_bounds = array<i64: 32, 4>}, {pipeline_mode = #tpu.pipeline_mode<synchronous>, transform_indices = @transform_2, window_bounds = array<i64: 32, 1>}, {pipeline_mode = #tpu.pipeline_mode<synchronous>, transform_indices = @transform_3, window_bounds = array<i64: 4, 32>}, {pipeline_mode = #tpu.pipeline_mode<synchronous>, transform_indices = @transform_4, window_bounds = array<i64: 4, 1>}, {transform_indices = @transform_5, window_bounds = array<i64: 2, 4, 16>}]} {
    %c0 = arith.constant 0 : index
    %c0_0 = arith.constant 0 : index
    %0 = vector.load %arg3[%c0, %c0_0] : memref<32x4xf32, #tpu.memory_space<vmem>>, vector<32x4xf32>
    %c0_1 = arith.constant 0 : index
    %c0_2 = arith.constant 0 : index
    %1 = vector.load %arg4[%c0_1, %c0_2] : memref<32x1xf32, #tpu.memory_space<vmem>>, vector<32x1xf32>
    %c0_3 = arith.constant 0 : index
    %c0_4 = arith.constant 0 : index
    %2 = vector.load %arg5[%c0_3, %c0_4] : memref<4x32xf32, #tpu.memory_space<vmem>>, vector<4x32xf32>
    %c0_5 = arith.constant 0 : index
    %c0_6 = arith.constant 0 : index
    %3 = vector.load %arg6[%c0_5, %c0_6] : memref<4x1xf32, #tpu.memory_space<vmem>>, vector<4x1xf32>
    %c0_i32 = arith.constant 0 : i32
    %c2_i32 = arith.constant 2 : i32
    %4 = arith.addi %c0_i32, %c2_i32 : i32
    %c1_i32 = arith.constant 1 : i32
    scf.for %arg8 = %c0_i32 to %4 step %c1_i32  : i32 {
      %5 = arith.index_cast %arg8 : i32 to index
      %c0_8 = arith.constant 0 : index
      %c0_9 = arith.constant 0 : index
      %6 = vector.load %arg2[%5, %c0_8, %c0_9] : memref<2x4x16xf32, #tpu.memory_space<vmem>>, vector<1x4x16xf32>
      %7 = vector.shape_cast %6 : vector<1x4x16xf32> to vector<4x16xf32>
      %cst = arith.constant dense<0.000000e+00> : vector<32x16xf32>
      %8 = tpu.matmul %0, %7, %cst {dimension_numbers = #tpu.dot_dimension_numbers<[1], [0], [0], [1], [0, 0, 1, 1], [], []>} : vector<32x4xf32>, vector<4x16xf32>, vector<32x16xf32> -> vector<32x16xf32>
      %9 = vector.broadcast %1 : vector<32x1xf32> to vector<32x16xf32>
      %10 = arith.addf %8, %9 : vector<32x16xf32>
      %cst_10 = arith.constant 5.000000e-01 : f32
      %11 = vector.broadcast %cst_10 : f32 to vector<32x16xf32>
      %12 = arith.mulf %11, %10 : vector<32x16xf32>
      %cst_11 = arith.constant 0.707106769 : f32
      %13 = vector.broadcast %cst_11 : f32 to vector<32x16xf32>
      %14 = arith.mulf %10, %13 : vector<32x16xf32>
      %15 = math.erf %14 : vector<32x16xf32>
      %cst_12 = arith.constant 1.000000e+00 : f32
      %16 = vector.broadcast %cst_12 : f32 to vector<32x16xf32>
      %17 = arith.addf %16, %15 : vector<32x16xf32>
      %18 = arith.mulf %12, %17 : vector<32x16xf32>
      %cst_13 = arith.constant dense<0.000000e+00> : vector<4x16xf32>
      %19 = tpu.matmul %2, %18, %cst_13 {dimension_numbers = #tpu.dot_dimension_numbers<[1], [0], [0], [1], [0, 0, 1, 1], [], []>} : vector<4x32xf32>, vector<32x16xf32>, vector<4x16xf32> -> vector<4x16xf32>
      %20 = vector.broadcast %3 : vector<4x1xf32> to vector<4x16xf32>
      %21 = arith.addf %19, %20 : vector<4x16xf32>
      %22 = arith.index_cast %arg8 : i32 to index
      %c0_14 = arith.constant 0 : index
      %c0_15 = arith.constant 0 : index
      %23 = vector.load %arg7[%22, %c0_14, %c0_15] : memref<2x4x16xf32, #tpu.memory_space<vmem>>, vector<1x4x16xf32>
      %24 = vector.shape_cast %23 : vector<1x4x16xf32> to vector<4x16xf32>
      %25 = vector.shape_cast %21 : vector<4x16xf32> to vector<1x4x16xf32>
      tpu.vector_store %arg7[%22, %c0_14, %c0_15], %25 {strides = array<i32>} : memref<2x4x16xf32, #tpu.memory_space<vmem>>, vector<1x4x16xf32>,
    }
    %c2_i32_7 = arith.constant 2 : i32
    return
  }
  func.func @transform_0(%arg0: i32, %arg1: i32) -> (i32, i32, i32) {
    %c0_i32 = arith.constant 0 : i32
    %c0_i32_0 = arith.constant 0 : i32
    return %arg0, %c0_i32, %arg1 : i32, i32, i32
  }
  func.func @transform_1(%arg0: i32, %arg1: i32) -> (i32, i32) {
    %c0_i32 = arith.constant 0 : i32
    %c0_i32_0 = arith.constant 0 : i32
    %c0_i32_1 = arith.constant 0 : i32
    return %c0_i32, %c0_i32_0 : i32, i32
  }
  func.func @transform_2(%arg0: i32, %arg1: i32) -> (i32, i32) {
    %c0_i32 = arith.constant 0 : i32
    %c0_i32_0 = arith.constant 0 : i32
    %c0_i32_1 = arith.constant 0 : i32
    return %c0_i32, %c0_i32_0 : i32, i32
  }
  func.func @transform_3(%arg0: i32, %arg1: i32) -> (i32, i32) {
    %c0_i32 = arith.constant 0 : i32
    %c0_i32_0 = arith.constant 0 : i32
    %c0_i32_1 = arith.constant 0 : i32
    return %c0_i32, %c0_i32_0 : i32, i32
  }
  func.func @transform_4(%arg0: i32, %arg1: i32) -> (i32, i32) {
    %c0_i32 = arith.constant 0 : i32
    %c0_i32_0 = arith.constant 0 : i32
    %c0_i32_1 = arith.constant 0 : i32
    return %c0_i32, %c0_i32_0 : i32, i32
  }
  func.func @transform_5(%arg0: i32, %arg1: i32) -> (i32, i32, i32) {
    %c0_i32 = arith.constant 0 : i32
    %c0_i32_0 = arith.constant 0 : i32
    return %arg0, %c0_i32, %arg1 : i32, i32, i32
  }
}

</mosaic_0001>

<llo_original>
// kernel: tpu_custom_call.1
$region0: #{tpu_custom_call.1}
  #allocation0 [shape = 'u32[]', space=smem, size = 0x4, offset = 0x4, fixed_abs, tag = 'smem constant byte address 0x4 - core index']
  #allocation1 [shape = 'u32[144,128]{1,0:T(1,128)}', space=vmem, size = 0x12000, scoped, tag = 'internal scratch']
  %s0 = inlined_call_operand.vmem [shape: f32[2,4,16], index: 0, kind: input, shape index: {}]
  %s1 = inlined_call_operand.vmem [shape: f32[32,4], index: 1, kind: input, shape index: {}]
  %s2 = inlined_call_operand.vmem [shape: f32[32,1], index: 2, kind: input, shape index: {}]
  %s3 = inlined_call_operand.vmem [shape: f32[4,32], index: 3, kind: input, shape index: {}]
  %s4 = inlined_call_operand.vmem [shape: f32[4,1], index: 4, kind: input, shape index: {}]
  %s5 = inlined_call_operand.hbm [shape: f32[2,4,16], index: 5, kind: output, shape index: {}]
  %s6 = sld [smem:[#allocation0]]
  $region37: #{tpu_custom_call.1} parent=0
    _
  %s8 = ssub.s32 1, %s6
  %s9 = scalar_select 0, %s8, %s6
  $region1: #{tpu_custom_call.1} parent=0
    #allocation2 [shape = 'u8[4096]{0}', space=vmem, size = 0x1000, scoped, tag = 'output window, operand 0, single buffered']
    #allocation3 [shape = 's32[1]{0}', space=sflag, size = 0x4, scoped, tag = 'scoped memory for tpu_custom_call.1']
    %10 = vsyncpa [#allocation3], 0
    // Predicated region
    $region2: #{tpu_custom_call.1} parent=1 // pred_check
      _
    $region3: #{tpu_custom_call.1} parent=1 // pred_check_branch
      %12 = sbr.rel (0) target = $region5
    $region4: #{tpu_custom_call.1} parent=1 // pred_region
      _
    $region5: #{tpu_custom_call.1} parent=1 // pred_fallthru
      _
    // Predicated region
    $region6: #{tpu_custom_call.1} parent=1 // pred_check
      _
    $region7: #{tpu_custom_call.1} parent=1 // pred_check_branch
      %14 = sbr.rel (0) target = $region9
    $region8: #{tpu_custom_call.1} parent=1 // pred_region
      _
    $region9: #{tpu_custom_call.1} parent=1 // pred_fallthru
      _
    // Predicated region
    $region10: #{tpu_custom_call.1} parent=1 // pred_check
      _
    $region11: #{tpu_custom_call.1} parent=1 // pred_check_branch
      %16 = sbr.rel (0) target = $region13
    $region12: #{tpu_custom_call.1} parent=1 // pred_region
      _
    $region13: #{tpu_custom_call.1} parent=1 // pred_fallthru
      _
    // Predicated region
    $region14: #{tpu_custom_call.1} parent=1 // pred_check
      _
    $region15: #{tpu_custom_call.1} parent=1 // pred_check_branch
      %18 = sbr.rel (0) target = $region17
    $region16: #{tpu_custom_call.1} parent=1 // pred_region
      _
    $region17: #{tpu_custom_call.1} parent=1 // pred_fallthru
      _
    // Predicated region
    $region18: #{tpu_custom_call.1} parent=1 // pred_check
      _
    $region19: #{tpu_custom_call.1} parent=1 // pred_check_branch
      %20 = sbr.rel (0) target = $region21
    $region20: #{tpu_custom_call.1} parent=1 // pred_region
      _
    $region21: #{tpu_custom_call.1} parent=1 // pred_fallthru
      _
    %v21 = vld [vmem:[%s1] sm:$0xff]
    %v22 = vld [vmem:[%s1 + $0x8] sm:$0xff]
    %v23 = vld [vmem:[%s1 + $0x10] sm:$0xff]
    %v24 = vld [vmem:[%s1 + $0x18] sm:$0xff]
    %v25 = vld [vmem:[%s2] sm:$0xff]
    %v26 = vld [vmem:[%s2 + $0x8] sm:$0xff]
    %v27 = vld [vmem:[%s2 + $0x10] sm:$0xff]
    %v28 = vld [vmem:[%s2 + $0x18] sm:$0xff]
    %v29 = vld [vmem:[%s3] sm:$0xf]
    %v30 = vld [vmem:[%s4] sm:$0xf]
    loop: start=0, step=1, limit=2
    $region22: #{tpu_custom_call.1} parent=1 // loop_pre_header
      _
    $region23: #{tpu_custom_call.1} parent=1 // loop_header
      %s32 = sphi 0, %s36
      %p33 = scmp.ge.s32.totalorder %s32, 2
    $region24: #{tpu_custom_call.1} parent=1 // loop_header_branch
      %35 = sbr.rel (%p33) target = $region28
    $region25: #{tpu_custom_call.1} parent=1 // loop_body
      %s37 = smul.u32 %s32, 4
      %s38 = scalar_lea.vmem %s0, %s37
      %v39 = vld [vmem:[%s38] sm:$0xf]
      %41 = vset.pattern.permute.xlu0 0
      %42 = vperm.xlu0 %41, %v25
      %v43 = vpop.permute.xlu0 %42
      %46 = vset.pattern.permute.xlu0 0
      %47 = vperm.xlu0 %46, %v26
      %v48 = vpop.permute.xlu0 %47
      %51 = vset.pattern.permute.xlu0 0
      %52 = vperm.xlu0 %51, %v27
      %v53 = vpop.permute.xlu0 %52
      %56 = vset.pattern.permute.xlu0 0
      %57 = vperm.xlu0 %56, %v28
      %v58 = vpop.permute.xlu0 %57
      %vm60 = vcmask 31744
      %v62 = vsel %vm60, %v21, 0
      %v65 = vsel %vm60, %v22, 0
      %v68 = vsel %vm60, %v23, 0
      %v71 = vsel %vm60, %v24, 0
      %vm73 = vcmask 1043456
      %v75 = vsel %vm73, %v39, 0
      %77 = vmatprep.subr.mxu0 0.0
      %78 = vmatpush1.msra.mxu0 %v75
      %79 = vmatprep.subr.mxu0 0.0
      %80 = vmatpush1.msra.mxu0 0.0
      %81 = vmatprep.subr.mxu0 0.0
      %82 = vmatpush1.msra.mxu0 0.0
      %83 = vmatprep.subr.mxu0 0.0
      %84 = vmatpush1.msra.mxu0 0.0
      %85 = vmatprep.subr.mxu0 0.0
      %86 = vmatpush1.msra.mxu0 0.0
      %87 = vmatprep.subr.mxu0 0.0
      %88 = vmatpush1.msra.mxu0 0.0
      %89 = vmatprep.subr.mxu0 0.0
      %90 = vmatpush1.msra.mxu0 0.0
      %91 = vmatprep.subr.mxu0 0.0
      %92 = vmatpush1.msra.mxu0 0.0
      %93 = vmatprep.subr.mxu0 0.0
      %94 = vmatpush1.msra.mxu0 0.0
      %95 = vmatprep.subr.mxu0 0.0
      %96 = vmatpush1.msra.mxu0 0.0
      %97 = vmatprep.subr.mxu0 0.0
      %98 = vmatpush1.msra.mxu0 0.0
      %99 = vmatprep.subr.mxu0 0.0
      %100 = vmatpush1.msra.mxu0 0.0
      %101 = vmatprep.subr.mxu0 0.0
      %102 = vmatpush1.msra.mxu0 0.0
      %103 = vmatprep.subr.mxu0 0.0
      %104 = vmatpush1.msra.mxu0 0.0
      %105 = vmatprep.subr.mxu0 0.0
      %106 = vmatpush1.msra.mxu0 0.0
      %107 = vmatprep.subr.mxu0 0.0
      %108 = vmatpush1.msra.mxu0 0.0
      %109 = vmatprep.subr.mxu0 0.0
      %110 = vmatpush1.msra.mxu0 0.0
      %111 = vmatprep.subr.mxu0 0.0
      %112 = vmatpush1.msra.mxu0 0.0
      %113 = vmatprep.subr.mxu0 0.0
      %114 = vmatpush1.msra.mxu0 0.0
      %115 = vmatprep.subr.mxu0 0.0
      %116 = vmatpush1.msra.mxu0 0.0
      %117 = vmatprep.subr.mxu0 0.0
      %118 = vmatpush1.msra.mxu0 0.0
      %119 = vmatprep.subr.mxu0 0.0
      %120 = vmatpush1.msra.mxu0 0.0
      %121 = vmatprep.subr.mxu0 0.0
      %122 = vmatpush1.msra.mxu0 0.0
      %123 = vmatprep.subr.mxu0 0.0
      %124 = vmatpush1.msra.mxu0 0.0
      %125 = vmatprep.subr.mxu0 0.0
      %126 = vmatpush1.msra.mxu0 0.0
      %127 = vmatprep.subr.mxu0 0.0
      %128 = vmatpush1.msra.mxu0 0.0
      %129 = vmatprep.subr.mxu0 0.0
      %130 = vmatpush1.msra.mxu0 0.0
      %131 = vmatprep.subr.mxu0 0.0
      %132 = vmatpush1.msra.mxu0 0.0
      %133 = vmatprep.subr.mxu0 0.0
      %134 = vmatpush1.msra.mxu0 0.0
      %135 = vmatprep.subr.mxu0 0.0
      %136 = vmatpush1.msra.mxu0 0.0
      %137 = vmatprep.subr.mxu0 0.0
      %138 = vmatpush1.msra.mxu0 0.0
      %139 = vmatprep.subr.mxu0 0.0
      %140 = vmatpush1.msra.mxu0 0.0
      %141 = vmatprep.mubr.f32.mxu0 0.0
      %142 = vmatmul.mubr.f32.gmra.mrb[0].mxu0 %v62
      %v143 = vpop.f32.mrb[0].mxu0
      %v144 = vadd.f32 %v43, %v143
      %v145 = vpop.f32.mrb[0].mxu0
      %146 = vmatprep.mubr.f32.mxu0 0.0
      %147 = vmatmul.mubr.f32.gmra.mrb[0].mxu0 %v65
      %v148 = vpop.f32.mrb[0].mxu0
      %v149 = vadd.f32 %v48, %v148
      %v150 = vpop.f32.mrb[0].mxu0
      %151 = vmatprep.mubr.f32.mxu0 0.0
      %152 = vmatmul.mubr.f32.gmra.mrb[0].mxu0 %v68
      %v153 = vpop.f32.mrb[0].mxu0
      %v154 = vadd.f32 %v53, %v153
      %v155 = vpop.f32.mrb[0].mxu0
      %156 = vmatprep.mubr.f32.mxu0 0.0
      %157 = vmatmul.mubr.f32.gmra.mrb[0].mxu0 %v71
      %v158 = vpop.f32.mrb[0].mxu0
      %v159 = vadd.f32 %v58, %v158
      %v160 = vpop.f32.mrb[0].mxu0
      %161 = vdwg.mxu0
      %v162 = vmul.f32 %v144, 0.5
      %v163 = vmul.f32 %v149, 0.5
      %v164 = vmul.f32 %v154, 0.5
      %v165 = vmul.f32 %v159, 0.5
      %v166 = vmul.f32 %v144, 0.70710677
      %v167 = vmul.f32 %v149, 0.70710677
      %v168 = vmul.f32 %v154, 0.70710677
      %v169 = vmul.f32 %v159, 0.70710677
      %v170 = verf.f32.pop %v166
      %v171 = verf.f32.pop %v167
      %v172 = verf.f32.pop %v168
      %v173 = verf.f32.pop %v169
      %v174 = vadd.f32 %v170, 1.0
      %v175 = vadd.f32 %v171, 1.0
      %v176 = vadd.f32 %v172, 1.0
      %v177 = vadd.f32 %v173, 1.0
      %v178 = vmul.f32 %v162, %v174
      %v179 = vmul.f32 %v163, %v175
      %v180 = vmul.f32 %v164, %v176
      %v181 = vmul.f32 %v165, %v177
      %183 = vset.pattern.permute.xlu0 0
      %184 = vperm.xlu0 %183, %v30
      %v185 = vpop.permute.xlu0 %184
      %vm187 = vcmask 261120
      %v189 = vsel %vm187, %v29, 0
      %191 = vmatprep.subr.mxu0 0.0
      %192 = vmatpush1.msra.mxu0 %v178
      %193 = vmatprep.subr.mxu0 0.0
      %194 = vmatpush1.msra.mxu0 %v179
      %195 = vmatprep.subr.mxu0 0.0
      %196 = vmatpush1.msra.mxu0 %v180
      %197 = vmatprep.subr.mxu0 0.0
      %198 = vmatpush1.msra.mxu0 %v181
      %199 = vmatprep.subr.mxu0 0.0
      %200 = vmatpush1.msra.mxu0 0.0
      %201 = vmatprep.subr.mxu0 0.0
      %202 = vmatpush1.msra.mxu0 0.0
      %203 = vmatprep.subr.mxu0 0.0
      %204 = vmatpush1.msra.mxu0 0.0
      %205 = vmatprep.subr.mxu0 0.0
      %206 = vmatpush1.msra.mxu0 0.0
      %207 = vmatprep.subr.mxu0 0.0
      %208 = vmatpush1.msra.mxu0 0.0
      %209 = vmatprep.subr.mxu0 0.0
      %210 = vmatpush1.msra.mxu0 0.0
      %211 = vmatprep.subr.mxu0 0.0
      %212 = vmatpush1.msra.mxu0 0.0
      %213 = vmatprep.subr.mxu0 0.0
      %214 = vmatpush1.msra.mxu0 0.0
      %215 = vmatprep.subr.mxu0 0.0
      %216 = vmatpush1.msra.mxu0 0.0
      %217 = vmatprep.subr.mxu0 0.0
      %218 = vmatpush1.msra.mxu0 0.0
      %219 = vmatprep.subr.mxu0 0.0
      %220 = vmatpush1.msra.mxu0 0.0
      %221 = vmatprep.subr.mxu0 0.0
      %222 = vmatpush1.msra.mxu0 0.0
      %223 = vmatprep.subr.mxu0 0.0
      %224 = vmatpush1.msra.mxu0 0.0
      %225 = vmatprep.subr.mxu0 0.0
      %226 = vmatpush1.msra.mxu0 0.0
      %227 = vmatprep.subr.mxu0 0.0
      %228 = vmatpush1.msra.mxu0 0.0
      %229 = vmatprep.subr.mxu0 0.0
      %230 = vmatpush1.msra.mxu0 0.0
      %231 = vmatprep.subr.mxu0 0.0
      %232 = vmatpush1.msra.mxu0 0.0
      %233 = vmatprep.subr.mxu0 0.0
      %234 = vmatpush1.msra.mxu0 0.0
      %235 = vmatprep.subr.mxu0 0.0
      %236 = vmatpush1.msra.mxu0 0.0
      %237 = vmatprep.subr.mxu0 0.0
      %238 = vmatpush1.msra.mxu0 0.0
      %239 = vmatprep.subr.mxu0 0.0
      %240 = vmatpush1.msra.mxu0 0.0
      %241 = vmatprep.subr.mxu0 0.0
      %242 = vmatpush1.msra.mxu0 0.0
      %243 = vmatprep.subr.mxu0 0.0
      %244 = vmatpush1.msra.mxu0 0.0
      %245 = vmatprep.subr.mxu0 0.0
      %246 = vmatpush1.msra.mxu0 0.0
      %247 = vmatprep.subr.mxu0 0.0
      %248 = vmatpush1.msra.mxu0 0.0
      %249 = vmatprep.subr.mxu0 0.0
      %250 = vmatpush1.msra.mxu0 0.0
      %251 = vmatprep.subr.mxu0 0.0
      %252 = vmatpush1.msra.mxu0 0.0
      %253 = vmatprep.subr.mxu0 0.0
      %254 = vmatpush1.msra.mxu0 0.0
      %255 = vmatprep.mubr.f32.mxu0 0.0
      %256 = vmatmul.mubr.f32.gmra.mrb[0].mxu0 %v189
      %v257 = vpop.f32.mrb[0].mxu0
      %v258 = vadd.f32 %v185, %v257
      %v259 = vpop.f32.mrb[0].mxu0
      %260 = vdwg.mxu0
      %s261 = scalar_lea.vmem [#allocation2], %s37
      %vm262 = vcmask 125952
      %263 = vst.msk [vmem:[%s261] sm:$0xf] %vm262, %v258
    $region26: #{tpu_custom_call.1} parent=1 // loop_footer
      %s36 = sadd.s32 1, %s32
    $region27: #{tpu_custom_call.1} parent=1 // loop_footer_branch
      %31 = sbr.rel target = $region23
    $region28: #{tpu_custom_call.1} parent=1 // loop_exit
      _
    // Predicated region
    $region29: #{tpu_custom_call.1} parent=1 // pred_check
      _
    $region30: #{tpu_custom_call.1} parent=1 // pred_check_branch
      %265 = sbr.rel (0) target = $region32
    $region31: #{tpu_custom_call.1} parent=1 // pred_region
      %s267 = ssub.s32 128, 128
      %268 = vsyncadd [#allocation3], %s267
      %s269 = sshll.u32 [#allocation2], 4
      %s270 = int_to_ptr.vmem [resolvable:$true] %s269
      %275 = dma.vmem_to_hbm [thread:$0]  %s270, 128, %s5, [#allocation3], 64, 64, 4
    $region32: #{tpu_custom_call.1} parent=1 // pred_fallthru
      _
    // Predicated region
    $region33: #{tpu_custom_call.1} parent=1 // pred_check
      _
    $region34: #{tpu_custom_call.1} parent=1 // pred_check_branch
      %277 = sbr.rel (0) target = $region36
    $region35: #{tpu_custom_call.1} parent=1 // pred_region
      %278 = dma.done [#allocation3], 128
    $region36: #{tpu_custom_call.1} parent=1 // pred_fallthru
      _
    %279 = vsyncpa [#allocation3], 1

</llo_original>
